<compile_context>
chip_gen: v7x
topology: tpu7x:2x2x1
jax: 0.10.0
libtpu: 0.0.40
codegen_flags: <defaults>
</compile_context>

<pallas_src>
import math

import jax
import jax.numpy as jnp
from jax.experimental import pallas as pl
from jax.experimental.pallas import tpu as pltpu


def _round_up(x, m):
    return (x + m - 1) // m * m


def _round_lane(n):
    """Lane-dense width: multiple of 128; odd 128-multiples above 128 are
    bumped to the next multiple of 256 (full MXU N tiles on v6e/v7x)."""
    p = _round_up(n, 128)
    if p > 128 and (p // 128) % 2 == 1:
        p = _round_up(p, 256)
    return p


def _pick_tile(total, requested, unit=128):
    """Largest multiple of `unit` that divides `total` and is <= requested."""
    t = max(unit, min(_round_up(requested, unit), total))
    while total % t:
        t -= unit
    return t


def sae_forward_kernel(x_ref, we_ref, be_ref, wd_ref, bd_ref,
                       recon_ref, z_ref, acc_ref):
    l = pl.program_id(1)

    @pl.when(l == 0)
    def _():
        acc_ref[...] = jnp.zeros_like(acc_ref)

    # Encoder: cast x f32 -> bf16 in-kernel (avoids a wrapper-side HBM copy),
    # bf16 MXU matmul with f32 accumulation, bias add + tanh (EUP) in f32.
    x_bf = x_ref[...].astype(jnp.bfloat16)
    z = jnp.tanh(
        jnp.dot(x_bf, we_ref[...], preferred_element_type=jnp.float32)
        + be_ref[...]
    )
    z_ref[...] = z.astype(z_ref.dtype)

    # Decoder partial sum over this latent block; f32 accumulator scratch.
    acc_ref[...] += jnp.dot(z.astype(jnp.bfloat16), wd_ref[...],
                            preferred_element_type=jnp.float32)

    # Finalize: add decoder bias and store recon on the last latent block.
    @pl.when(l == pl.num_programs(1) - 1)
    def _():
        recon_ref[...] = (acc_ref[...] + bd_ref[...]).astype(recon_ref.dtype)


def prepare_params(we, be, wd, bd):
    """Pad + cast parameters ONCE (reused every forward call).

    we: [D, L]  encoder weight (pre-transposed from torch [L, D])
    be: [L]     encoder bias
    wd: [L, D]  decoder weight (pre-transposed from torch [D, L])
    bd: [D]     decoder bias
    """
    D, L = we.shape
    Dp, Lp = _round_lane(D), _round_lane(L)
    be = jnp.asarray(be, jnp.float32).reshape(1, -1)
    bd = jnp.asarray(bd, jnp.float32).reshape(1, -1)
    # Zero padding: padded feature/latent rows & cols contribute nothing to the
    # valid [:B, :D] / [:B, :L] output slices.
    we_p = jnp.zeros((Dp, Lp), jnp.bfloat16).at[:D, :L].set(we.astype(jnp.bfloat16))
    wd_p = jnp.zeros((Lp, Dp), jnp.bfloat16).at[:L, :D].set(wd.astype(jnp.bfloat16))
    be_p = jnp.zeros((1, Lp), jnp.float32).at[:, :L].set(be)
    bd_p = jnp.zeros((1, Dp), jnp.float32).at[:, :D].set(bd)
    return {"we": we_p, "be": be_p, "wd": wd_p, "bd": bd_p, "D": D, "L": L}


def sparse_autoencoder_forward(x, params, *, block_batch=256, block_latent=512):
    """Forward pass.  x: [B, D] f32.  Returns (x_recon [B, D] f32, z [B, L] f32)."""
    D, L = params["D"], params["L"]
    we_p, be_p, wd_p, bd_p = params["we"], params["be"], params["wd"], params["bd"]
    Dp, Lp = we_p.shape
    B = x.shape[0]

    # Latent tile: multiple of 128 dividing Lp (weights stream over this axis).
    TL = _pick_tile(Lp, block_latent, 128)

    # Batch tile: default 256 fills the v6e/v7x MXU M dimension (2x v5e) and
    # amortizes per-grid-step overhead; never degenerate to tiny tiles.
    TB = max(16, _round_up(block_batch, 16))

    # Generation-aware VMEM budget.
    try:
        vmem_phys = pltpu.get_tpu_info().vmem_capacity_bytes
    except Exception:
        vmem_phys = 64 * 1024 * 1024
    if vmem_phys >= 100 * 1024 * 1024:
        vmem_cap = 104 * 1024 * 1024   # v5e / v6e: 128 MiB physical
    else:
        vmem_cap = 56 * 1024 * 1024    # v7x: 64 MiB physical, leave scratch headroom

    def working_set(tb):
        return (2 * tb * Dp * 4        # x tiles (f32, double-buffered)
                + 2 * Dp * TL * 2      # We tiles (bf16, streamed over l)
                + 2 * TL * 4           # be tiles
                + 2 * TL * Dp * 2      # Wd tiles (bf16, streamed over l)
                + 2 * Dp * 4           # bd (constant block)
                + 2 * tb * Dp * 4      # recon out tiles (f32)
                + 2 * tb * TL * 4      # z out tiles (f32)
                + tb * Dp * 4)         # f32 decoder accumulator scratch

    # Re-derive the per-step working set against the budget; halve TB if needed
    # (keeps double-buffering alive instead of letting the compiler serialize).
    while TB > 64 and working_set(TB) > vmem_cap - 8 * 1024 * 1024:
        TB //= 2

    Bp = _round_up(max(B, TB), TB)

    # Only pad/copy x when its layout is not already lane-dense & tile-aligned.
    if x.shape == (Bp, Dp) and x.dtype == jnp.float32:
        x_p = x
    else:
        x_p = jnp.zeros((Bp, Dp), jnp.float32).at[:B, :D].set(x.astype(jnp.float32))

    vmem_limit = int(min(max(working_set(TB) + 8 * 1024 * 1024,
                             32 * 1024 * 1024),
                         vmem_cap))

    grid = (Bp // TB, Lp // TL)

    recon_p, z_p = pl.pallas_call(
        sae_forward_kernel,
        out_shape=(
            jax.ShapeDtypeStruct((Bp, Dp), jnp.float32),   # x_recon (padded)
            jax.ShapeDtypeStruct((Bp, Lp), jnp.float32),   # z       (padded)
        ),
        grid_spec=pltpu.PrefetchScalarGridSpec(
            num_scalar_prefetch=0,
            grid=grid,
            in_specs=[
                pl.BlockSpec((TB, Dp), lambda i, l: (i, 0)),   # x tile
                pl.BlockSpec((Dp, TL), lambda i, l: (0, l)),   # We latent block
                pl.BlockSpec((1, TL), lambda i, l: (0, l)),    # be latent block
                pl.BlockSpec((TL, Dp), lambda i, l: (l, 0)),   # Wd latent block
                pl.BlockSpec((1, Dp), lambda i, l: (0, 0)),    # bd (constant)
            ],
            out_specs=(
                pl.BlockSpec((TB, Dp), lambda i, l: (i, 0)),   # recon (revisited over l)
                pl.BlockSpec((TB, TL), lambda i, l: (i, l)),   # z block
            ),
            scratch_shapes=[pltpu.VMEM((TB, Dp), jnp.float32)],  # decoder accumulator
        ),
        compiler_params=pltpu.CompilerParams(
            dimension_semantics=("parallel", "arbitrary"),
            vmem_limit_bytes=vmem_limit,
        ),
    )(x_p, we_p, be_p, wd_p, bd_p)

    return recon_p[:B, :D], z_p[:B, :L]


def kaiming_uniform_relu(key, shape):
    """Mimics torch.nn.init.kaiming_uniform_(w, nonlinearity='relu').

    PyTorch Linear weight shape is [out, in]; fan_in = in = shape[1].
    bound = sqrt(2) * sqrt(3 / fan_in) = sqrt(6 / fan_in).
    """
    fan_in = shape[1]
    bound = math.sqrt(6.0 / fan_in)
    return jax.random.uniform(key, shape, jnp.float32, -bound, bound)


def init_params(key, input_dim, latent_dim):
    k_enc, k_dec = jax.random.split(key)
    # PyTorch layout: weight [out, in]; kernel wants [in, out] -> transpose.
    we = kaiming_uniform_relu(k_enc, (latent_dim, input_dim)).T   # [D, L]
    wd = kaiming_uniform_relu(k_dec, (input_dim, latent_dim)).T   # [L, D]
    be = jnp.full((latent_dim,), 0.01, jnp.float32)
    bd = jnp.full((input_dim,), 0.01, jnp.float32)
    return we, be, wd, bd


def _reference(x, we, be, wd, bd):
    """Pure-JAX reference with the same bf16-in / f32-accumulate numerics."""
    z = jnp.tanh(
        jnp.dot(x.astype(jnp.bfloat16), we.astype(jnp.bfloat16),
                preferred_element_type=jnp.float32) + be.reshape(1, -1))
    recon = jnp.dot(z.astype(jnp.bfloat16), wd.astype(jnp.bfloat16),
                    preferred_element_type=jnp.float32) + bd.reshape(1, -1)
    return recon, z


if __name__ == "__main__":
    key = jax.random.PRNGKey(0)

    # --- Config 1: module defaults (latent_dim=4), single grid step ----------
    k_x, k_p, key = jax.random.split(key, 3)
    batch, input_dim, latent_dim = 48, 32, 4
    x = jax.random.normal(k_x, (batch, input_dim), jnp.float32)
    we, be, wd, bd = init_params(k_p, input_dim, latent_dim)
    params = prepare_params(we, be, wd, bd)

    x_recon, z = sparse_autoencoder_forward(x, params)
    jax.block_until_ready((x_recon, z))

    recon_ref, z_ref = _reference(x, we, be, wd, bd)
    assert x_recon.shape == (batch, input_dim)
    assert z.shape == (batch, latent_dim)
    assert jnp.allclose(z, z_ref, atol=2e-2), float(jnp.max(jnp.abs(z - z_ref)))
    assert jnp.allclose(x_recon, recon_ref, atol=2e-2), float(
        jnp.max(jnp.abs(x_recon - recon_ref)))

    # --- Config 2: exercises the 2-D grid (2 batch steps x 4 latent steps) ---
    k_x2, k_p2, key = jax.random.split(key, 3)
    batch2, input_dim2, latent_dim2 = 200, 160, 300
    x2 = jax.random.normal(k_x2, (batch2, input_dim2), jnp.float32)
    we2, be2, wd2, bd2 = init_params(k_p2, input_dim2, latent_dim2)
    params2 = prepare_params(we2, be2, wd2, bd2)

    x_recon2, z2 = sparse_autoencoder_forward(
        x2, params2, block_batch=128, block_latent=128)
    jax.block_until_ready((x_recon2, z2))

    recon_ref2, z_ref2 = _reference(x2, we2, be2, wd2, bd2)
    assert x_recon2.shape == (batch2, input_dim2)
    assert z2.shape == (batch2, latent_dim2)
    assert jnp.allclose(z2, z_ref2, atol=2e-2), float(
        jnp.max(jnp.abs(z2 - z_ref2)))
    assert jnp.allclose(x_recon2, recon_ref2, atol=2e-2), float(
        jnp.max(jnp.abs(x_recon2 - recon_ref2)))

    print("KERNEL_OK")
</pallas_src>

<mosaic_0001>
module attributes {stable_mosaic.version = 11 : i64} {
  func.func @sae_forward_kernel(%arg0: i32, %arg1: i32, %arg2: memref<256x128xf32, #tpu.memory_space<vmem>>, %arg3: memref<128x128xbf16, #tpu.memory_space<vmem>>, %arg4: memref<1x128xf32, #tpu.memory_space<vmem>>, %arg5: memref<128x128xbf16, #tpu.memory_space<vmem>>, %arg6: memref<1x128xf32, #tpu.memory_space<vmem>>, %arg7: memref<256x128xf32, #tpu.memory_space<vmem>>, %arg8: memref<256x128xf32, #tpu.memory_space<vmem>>, %arg9: memref<256x128xf32, #tpu.memory_space<vmem>>) attributes {dimension_semantics = [#tpu.dimension_semantics<parallel>, #tpu.dimension_semantics<arbitrary>], iteration_bounds = array<i64: 1, 1>, scalar_prefetch = 0 : i64, scratch_operands = 1 : i64, tpu.core_type = #tpu.core_type<tc>, window_params = [{transform_indices = @transform_0, window_bounds = array<i64: 256, 128>}, {transform_indices = @transform_1, window_bounds = array<i64: 128, 128>}, {transform_indices = @transform_2, window_bounds = array<i64: 1, 128>}, {transform_indices = @transform_3, window_bounds = array<i64: 128, 128>}, {pipeline_mode = #tpu.pipeline_mode<synchronous>, transform_indices = @transform_4, window_bounds = array<i64: 1, 128>}, {transform_indices = @transform_5, window_bounds = array<i64: 256, 128>}, {transform_indices = @transform_6, window_bounds = array<i64: 256, 128>}]} {
    %c0_i32 = arith.constant 0 : i32
    %0 = arith.cmpi eq, %arg1, %c0_i32 : i32
    %1 = arith.extui %0 : i1 to i32
    %c0_i32_0 = arith.constant 0 : i32
    %2 = arith.cmpi ne, %1, %c0_i32_0 : i32
    scf.if %2 {
      %cst_17 = arith.constant 0.000000e+00 : f32
      %21 = vector.broadcast %cst_17 : f32 to vector<256x128xf32>
      %c0_18 = arith.constant 0 : index
      %c0_19 = arith.constant 0 : index
      %22 = vector.load %arg9[%c0_18, %c0_19] : memref<256x128xf32, #tpu.memory_space<vmem>>, vector<256x128xf32>
      tpu.vector_store %arg9[%c0_18, %c0_19], %21 {strides = array<i32>} : memref<256x128xf32, #tpu.memory_space<vmem>>, vector<256x128xf32>,
    } else {
    }
    %c0 = arith.constant 0 : index
    %c0_1 = arith.constant 0 : index
    %3 = vector.load %arg2[%c0, %c0_1] : memref<256x128xf32, #tpu.memory_space<vmem>>, vector<256x128xf32>
    %4 = arith.truncf %3 : vector<256x128xf32> to vector<256x128xbf16>
    %c0_2 = arith.constant 0 : index
    %c0_3 = arith.constant 0 : index
    %5 = vector.load %arg3[%c0_2, %c0_3] : memref<128x128xbf16, #tpu.memory_space<vmem>>, vector<128x128xbf16>
    %cst = arith.constant dense<0.000000e+00> : vector<256x128xf32>
    %6 = tpu.matmul %4, %5, %cst {dimension_numbers = #tpu.dot_dimension_numbers<[1], [0], [0], [1], [0, 0, 1, 1], [], []>} : vector<256x128xbf16>, vector<128x128xbf16>, vector<256x128xf32> -> vector<256x128xf32>
    %c0_4 = arith.constant 0 : index
    %c0_5 = arith.constant 0 : index
    %7 = vector.load %arg4[%c0_4, %c0_5] : memref<1x128xf32, #tpu.memory_space<vmem>>, vector<1x128xf32>
    %8 = vector.broadcast %7 : vector<1x128xf32> to vector<256x128xf32>
    %9 = arith.addf %6, %8 : vector<256x128xf32>
    %10 = math.tanh %9 : vector<256x128xf32>
    %c0_6 = arith.constant 0 : index
    %c0_7 = arith.constant 0 : index
    %11 = vector.load %arg8[%c0_6, %c0_7] : memref<256x128xf32, #tpu.memory_space<vmem>>, vector<256x128xf32>
    tpu.vector_store %arg8[%c0_6, %c0_7], %10 {strides = array<i32>} : memref<256x128xf32, #tpu.memory_space<vmem>>, vector<256x128xf32>,
    %c0_8 = arith.constant 0 : index
    %c0_9 = arith.constant 0 : index
    %12 = vector.load %arg9[%c0_8, %c0_9] : memref<256x128xf32, #tpu.memory_space<vmem>>, vector<256x128xf32>
    %13 = arith.truncf %10 : vector<256x128xf32> to vector<256x128xbf16>
    %c0_10 = arith.constant 0 : index
    %c0_11 = arith.constant 0 : index
    %14 = vector.load %arg5[%c0_10, %c0_11] : memref<128x128xbf16, #tpu.memory_space<vmem>>, vector<128x128xbf16>
    %cst_12 = arith.constant dense<0.000000e+00> : vector<256x128xf32>
    %15 = tpu.matmul %13, %14, %cst_12 {dimension_numbers = #tpu.dot_dimension_numbers<[1], [0], [0], [1], [0, 0, 1, 1], [], []>} : vector<256x128xbf16>, vector<128x128xbf16>, vector<256x128xf32> -> vector<256x128xf32>
    %16 = arith.addf %12, %15 : vector<256x128xf32>
    %c0_13 = arith.constant 0 : index
    %c0_14 = arith.constant 0 : index
    %17 = vector.load %arg9[%c0_13, %c0_14] : memref<256x128xf32, #tpu.memory_space<vmem>>, vector<256x128xf32>
    tpu.vector_store %arg9[%c0_13, %c0_14], %16 {strides = array<i32>} : memref<256x128xf32, #tpu.memory_space<vmem>>, vector<256x128xf32>,
    %c0_i32_15 = arith.constant 0 : i32
    %18 = arith.cmpi eq, %arg1, %c0_i32_15 : i32
    %19 = arith.extui %18 : i1 to i32
    %c0_i32_16 = arith.constant 0 : i32
    %20 = arith.cmpi ne, %19, %c0_i32_16 : i32
    scf.if %20 {
      %c0_17 = arith.constant 0 : index
      %c0_18 = arith.constant 0 : index
      %21 = vector.load %arg9[%c0_17, %c0_18] : memref<256x128xf32, #tpu.memory_space<vmem>>, vector<256x128xf32>
      %c0_19 = arith.constant 0 : index
      %c0_20 = arith.constant 0 : index
      %22 = vector.load %arg6[%c0_19, %c0_20] : memref<1x128xf32, #tpu.memory_space<vmem>>, vector<1x128xf32>
      %23 = vector.broadcast %22 : vector<1x128xf32> to vector<256x128xf32>
      %24 = arith.addf %21, %23 : vector<256x128xf32>
      %c0_21 = arith.constant 0 : index
      %c0_22 = arith.constant 0 : index
      %25 = vector.load %arg7[%c0_21, %c0_22] : memref<256x128xf32, #tpu.memory_space<vmem>>, vector<256x128xf32>
      tpu.vector_store %arg7[%c0_21, %c0_22], %24 {strides = array<i32>} : memref<256x128xf32, #tpu.memory_space<vmem>>, vector<256x128xf32>,
    } else {
    }
    return
  }
  func.func @transform_0(%arg0: i32, %arg1: i32) -> (i32, i32) {
    %c0_i32 = arith.constant 0 : i32
    %c0_i32_0 = arith.constant 0 : i32
    return %arg0, %c0_i32 : i32, i32
  }
  func.func @transform_1(%arg0: i32, %arg1: i32) -> (i32, i32) {
    %c0_i32 = arith.constant 0 : i32
    %c0_i32_0 = arith.constant 0 : i32
    return %c0_i32, %arg1 : i32, i32
  }
  func.func @transform_2(%arg0: i32, %arg1: i32) -> (i32, i32) {
    %c0_i32 = arith.constant 0 : i32
    %c0_i32_0 = arith.constant 0 : i32
    return %c0_i32, %arg1 : i32, i32
  }
  func.func @transform_3(%arg0: i32, %arg1: i32) -> (i32, i32) {
    %c0_i32 = arith.constant 0 : i32
    %c0_i32_0 = arith.constant 0 : i32
    return %arg1, %c0_i32 : i32, i32
  }
  func.func @transform_4(%arg0: i32, %arg1: i32) -> (i32, i32) {
    %c0_i32 = arith.constant 0 : i32
    %c0_i32_0 = arith.constant 0 : i32
    %c0_i32_1 = arith.constant 0 : i32
    return %c0_i32, %c0_i32_0 : i32, i32
  }
  func.func @transform_5(%arg0: i32, %arg1: i32) -> (i32, i32) {
    %c0_i32 = arith.constant 0 : i32
    %c0_i32_0 = arith.constant 0 : i32
    return %arg0, %c0_i32 : i32, i32
  }
  func.func @transform_6(%arg0: i32, %arg1: i32) -> (i32, i32) {
    %c0_i32 = arith.constant 0 : i32
    return %arg0, %arg1 : i32, i32
  }
}

</mosaic_0001>

<llo_original>
// kernel: tpu_custom_call.1
$region0: #{tpu_custom_call.1}
  #allocation0 [shape = 'u32[]', space=smem, size = 0x4, offset = 0x4, fixed_abs, tag = 'smem constant byte address 0x4 - core index']
  #allocation1 [shape = 'u32[144,128]{1,0:T(1,128)}', space=vmem, size = 0x12000, scoped, tag = 'internal scratch']
  #allocation2 [shape = 'f32[256,128]{1,0:T(8,128)}', space=vmem, size = 0x20000, scoped, tag = 'scratch operand']
  %s0 = inlined_call_operand.hbm [shape: f32[256,128], index: 0, kind: input, shape index: {}]
  %s1 = inlined_call_operand.hbm [shape: bf16[128,128], index: 1, kind: input, shape index: {}]
  %s2 = inlined_call_operand.vmem [shape: f32[1,128], index: 2, kind: input, shape index: {}]
  %s3 = inlined_call_operand.hbm [shape: bf16[128,128], index: 3, kind: input, shape index: {}]
  %s4 = inlined_call_operand.vmem [shape: f32[1,128], index: 4, kind: input, shape index: {}]
  %s5 = inlined_call_operand.hbm [shape: f32[256,128], index: 5, kind: output, shape index: {0}]
  %s6 = inlined_call_operand.hbm [shape: f32[256,128], index: 6, kind: output, shape index: {1}]
  %7 = xla_tuple %s5, %s6
  %s8 = sld [smem:[#allocation0]]
  $region58: #{tpu_custom_call.1} parent=0
    _
  %s10 = ssub.s32 1, %s8
  %s11 = scalar_select 0, %s10, %s8
  $region1: #{tpu_custom_call.1} parent=0
    #allocation3 [shape = 'u8[131072]{0}', space=vmem, size = 0x20000, scoped, tag = 'input window, operand 0, single buffered']
    #allocation4 [shape = 's32[1]{0}', space=sflag, size = 0x4, scoped, tag = 'scoped memory for tpu_custom_call.1']
    #allocation5 [shape = 's32[1]{0}', space=sflag, size = 0x4, scoped, tag = 'scoped memory for tpu_custom_call.1']
    #allocation6 [shape = 'u8[32768]{0}', space=vmem, size = 0x8000, scoped, tag = 'input window, operand 1, single buffered']
    #allocation7 [shape = 's32[1]{0}', space=sflag, size = 0x4, scoped, tag = 'scoped memory for tpu_custom_call.1']
    #allocation8 [shape = 'u8[32768]{0}', space=vmem, size = 0x8000, scoped, tag = 'input window, operand 3, single buffered']
    #allocation9 [shape = 'u8[131072]{0}', space=vmem, size = 0x20000, scoped, tag = 'output window, operand 0, single buffered']
    #allocation10 [shape = 'u8[131072]{0}', space=vmem, size = 0x20000, scoped, tag = 'output window, operand 1, single buffered']
    #allocation11 [shape = 's32[1]{0}', space=sflag, size = 0x4, scoped, tag = 'scoped memory for tpu_custom_call.1']
    %12 = vsyncpa [#allocation4], 0
    %13 = vsyncpa [#allocation7], 0
    %14 = vsyncpa [#allocation5], 0
    %15 = vsyncpa [#allocation11], 0
    // Predicated region
    $region2: #{tpu_custom_call.1} parent=1 // pred_check
      _
    $region3: #{tpu_custom_call.1} parent=1 // pred_check_branch
      %17 = sbr.rel (0) target = $region5
    $region4: #{tpu_custom_call.1} parent=1 // pred_region
      %s19 = ssub.s32 4096, 4096
      %20 = vsyncadd [#allocation4], %s19
      %s21 = sshll.u32 [#allocation3], 4
      %s22 = int_to_ptr.vmem [resolvable:$true] %s21
      %27 = dma.hbm_to_vmem [thread:$0]  %s0, 4096, %s22, [#allocation4], 128, 128, 8
    $region5: #{tpu_custom_call.1} parent=1 // pred_fallthru
      _
    // Predicated region
    $region6: #{tpu_custom_call.1} parent=1 // pred_check
      _
    $region7: #{tpu_custom_call.1} parent=1 // pred_check_branch
      %29 = sbr.rel (0) target = $region9
    $region8: #{tpu_custom_call.1} parent=1 // pred_region
      %s31 = ssub.s32 1024, 1024
      %32 = vsyncadd [#allocation7], %s31
      %s33 = sshll.u32 [#allocation6], 4
      %s34 = int_to_ptr.vmem [resolvable:$true] %s33
      %39 = dma.hbm_to_vmem [thread:$0]  %s1, 1024, %s34, [#allocation7], 64, 64, 4
    $region9: #{tpu_custom_call.1} parent=1 // pred_fallthru
      _
    // Predicated region
    $region10: #{tpu_custom_call.1} parent=1 // pred_check
      _
    $region11: #{tpu_custom_call.1} parent=1 // pred_check_branch
      %41 = sbr.rel (0) target = $region13
    $region12: #{tpu_custom_call.1} parent=1 // pred_region
      _
    $region13: #{tpu_custom_call.1} parent=1 // pred_fallthru
      _
    // Predicated region
    $region14: #{tpu_custom_call.1} parent=1 // pred_check
      _
    $region15: #{tpu_custom_call.1} parent=1 // pred_check_branch
      %43 = sbr.rel (0) target = $region17
    $region16: #{tpu_custom_call.1} parent=1 // pred_region
      %s45 = ssub.s32 1024, 1024
      %46 = vsyncadd [#allocation7], %s45
      %s47 = sshll.u32 [#allocation8], 4
      %s48 = int_to_ptr.vmem [resolvable:$true] %s47
      %53 = dma.hbm_to_vmem [thread:$0]  %s3, 1024, %s48, [#allocation7], 64, 64, 4
    $region17: #{tpu_custom_call.1} parent=1 // pred_fallthru
      _
    // Predicated region
    $region18: #{tpu_custom_call.1} parent=1 // pred_check
      _
    $region19: #{tpu_custom_call.1} parent=1 // pred_check_branch
      %55 = sbr.rel (0) target = $region21
    $region20: #{tpu_custom_call.1} parent=1 // pred_region
      _
    $region21: #{tpu_custom_call.1} parent=1 // pred_fallthru
      _
    // Predicated region
    $region22: #{tpu_custom_call.1} parent=1 // pred_check
      _
    $region23: #{tpu_custom_call.1} parent=1 // pred_check_branch
      %57 = sbr.rel (0) target = $region25
    $region24: #{tpu_custom_call.1} parent=1 // pred_region
      %58 = dma.done [#allocation4], 4096
    $region25: #{tpu_custom_call.1} parent=1 // pred_fallthru
      _
    // Predicated region
    $region26: #{tpu_custom_call.1} parent=1 // pred_check
      _
    $region27: #{tpu_custom_call.1} parent=1 // pred_check_branch
      %60 = sbr.rel (0) target = $region29
    $region28: #{tpu_custom_call.1} parent=1 // pred_region
      %61 = dma.done [#allocation7], 1024
    $region29: #{tpu_custom_call.1} parent=1 // pred_fallthru
      _
    // Predicated region
    $region30: #{tpu_custom_call.1} parent=1 // pred_check
      _
    $region31: #{tpu_custom_call.1} parent=1 // pred_check_branch
      %63 = sbr.rel (0) target = $region33
    $region32: #{tpu_custom_call.1} parent=1 // pred_region
      %64 = dma.done [#allocation7], 1024
    $region33: #{tpu_custom_call.1} parent=1 // pred_fallthru
      _
    %p66 = scmp.eq.s32.totalorder 0, 0
    // Predicated region
    $region34: #{tpu_custom_call.1} parent=1 // pred_check
      %p67 = pneg %p66
    $region35: #{tpu_custom_call.1} parent=1 // pred_check_branch
      %69 = sbr.rel (%p67) target = $region37
    $region36: #{tpu_custom_call.1} parent=1 // pred_region
      %70 = vst [vmem:[#allocation2] sm:$0xff] 0.0
      %71 = vst [vmem:[#allocation2 + $0x8] sm:$0xff] 0.0
      %72 = vst [vmem:[#allocation2 + $0x10] sm:$0xff] 0.0
      %73 = vst [vmem:[#allocation2 + $0x18] sm:$0xff] 0.0
      %74 = vst [vmem:[#allocation2 + $0x20] sm:$0xff] 0.0
      %75 = vst [vmem:[#allocation2 + $0x28] sm:$0xff] 0.0
      %76 = vst [vmem:[#allocation2 + $0x30] sm:$0xff] 0.0
      %77 = vst [vmem:[#allocation2 + $0x38] sm:$0xff] 0.0
      %78 = vst [vmem:[#allocation2 + $0x40] sm:$0xff] 0.0
      %79 = vst [vmem:[#allocation2 + $0x48] sm:$0xff] 0.0
      %80 = vst [vmem:[#allocation2 + $0x50] sm:$0xff] 0.0
      %81 = vst [vmem:[#allocation2 + $0x58] sm:$0xff] 0.0
      %82 = vst [vmem:[#allocation2 + $0x60] sm:$0xff] 0.0
      %83 = vst [vmem:[#allocation2 + $0x68] sm:$0xff] 0.0
      %84 = vst [vmem:[#allocation2 + $0x70] sm:$0xff] 0.0
      %85 = vst [vmem:[#allocation2 + $0x78] sm:$0xff] 0.0
      %86 = vst [vmem:[#allocation2 + $0x80] sm:$0xff] 0.0
      %87 = vst [vmem:[#allocation2 + $0x88] sm:$0xff] 0.0
      %88 = vst [vmem:[#allocation2 + $0x90] sm:$0xff] 0.0
      %89 = vst [vmem:[#allocation2 + $0x98] sm:$0xff] 0.0
      %90 = vst [vmem:[#allocation2 + $0xa0] sm:$0xff] 0.0
      %91 = vst [vmem:[#allocation2 + $0xa8] sm:$0xff] 0.0
      %92 = vst [vmem:[#allocation2 + $0xb0] sm:$0xff] 0.0
      %93 = vst [vmem:[#allocation2 + $0xb8] sm:$0xff] 0.0
      %94 = vst [vmem:[#allocation2 + $0xc0] sm:$0xff] 0.0
      %95 = vst [vmem:[#allocation2 + $0xc8] sm:$0xff] 0.0
      %96 = vst [vmem:[#allocation2 + $0xd0] sm:$0xff] 0.0
      %97 = vst [vmem:[#allocation2 + $0xd8] sm:$0xff] 0.0
      %98 = vst [vmem:[#allocation2 + $0xe0] sm:$0xff] 0.0
      %99 = vst [vmem:[#allocation2 + $0xe8] sm:$0xff] 0.0
      %100 = vst [vmem:[#allocation2 + $0xf0] sm:$0xff] 0.0
      %101 = vst [vmem:[#allocation2 + $0xf8] sm:$0xff] 0.0
    $region37: #{tpu_custom_call.1} parent=1 // pred_fallthru
      _
    %v102 = vld [vmem:[#allocation3] sm:$0xff]
    %v103 = vld [vmem:[#allocation3 + $0x8] sm:$0xff]
    %v104 = vld [vmem:[#allocation3 + $0x10] sm:$0xff]
    %v105 = vld [vmem:[#allocation3 + $0x18] sm:$0xff]
    %v106 = vld [vmem:[#allocation3 + $0x20] sm:$0xff]
    %v107 = vld [vmem:[#allocation3 + $0x28] sm:$0xff]
    %v108 = vld [vmem:[#allocation3 + $0x30] sm:$0xff]
    %v109 = vld [vmem:[#allocation3 + $0x38] sm:$0xff]
    %v110 = vld [vmem:[#allocation3 + $0x40] sm:$0xff]
    %v111 = vld [vmem:[#allocation3 + $0x48] sm:$0xff]
    %v112 = vld [vmem:[#allocation3 + $0x50] sm:$0xff]
    %v113 = vld [vmem:[#allocation3 + $0x58] sm:$0xff]
    %v114 = vld [vmem:[#allocation3 + $0x60] sm:$0xff]
    %v115 = vld [vmem:[#allocation3 + $0x68] sm:$0xff]
    %v116 = vld [vmem:[#allocation3 + $0x70] sm:$0xff]
    %v117 = vld [vmem:[#allocation3 + $0x78] sm:$0xff]
    %v118 = vld [vmem:[#allocation3 + $0x80] sm:$0xff]
    %v119 = vld [vmem:[#allocation3 + $0x88] sm:$0xff]
    %v120 = vld [vmem:[#allocation3 + $0x90] sm:$0xff]
    %v121 = vld [vmem:[#allocation3 + $0x98] sm:$0xff]
    %v122 = vld [vmem:[#allocation3 + $0xa0] sm:$0xff]
    %v123 = vld [vmem:[#allocation3 + $0xa8] sm:$0xff]
    %v124 = vld [vmem:[#allocation3 + $0xb0] sm:$0xff]
    %v125 = vld [vmem:[#allocation3 + $0xb8] sm:$0xff]
    %v126 = vld [vmem:[#allocation3 + $0xc0] sm:$0xff]
    %v127 = vld [vmem:[#allocation3 + $0xc8] sm:$0xff]
    %v128 = vld [vmem:[#allocation3 + $0xd0] sm:$0xff]
    %v129 = vld [vmem:[#allocation3 + $0xd8] sm:$0xff]
    %v130 = vld [vmem:[#allocation3 + $0xe0] sm:$0xff]
    %v131 = vld [vmem:[#allocation3 + $0xe8] sm:$0xff]
    %v132 = vld [vmem:[#allocation3 + $0xf0] sm:$0xff]
    %v133 = vld [vmem:[#allocation3 + $0xf8] sm:$0xff]
    %v134 = vpack.c.bf16 %v103, %v102
    %v135 = vpack.c.bf16 %v105, %v104
    %v136 = vpack.c.bf16 %v107, %v106
    %v137 = vpack.c.bf16 %v109, %v108
    %v138 = vpack.c.bf16 %v111, %v110
    %v139 = vpack.c.bf16 %v113, %v112
    %v140 = vpack.c.bf16 %v115, %v114
    %v141 = vpack.c.bf16 %v117, %v116
    %v142 = vpack.c.bf16 %v119, %v118
    %v143 = vpack.c.bf16 %v121, %v120
    %v144 = vpack.c.bf16 %v123, %v122
    %v145 = vpack.c.bf16 %v125, %v124
    %v146 = vpack.c.bf16 %v127, %v126
    %v147 = vpack.c.bf16 %v129, %v128
    %v148 = vpack.c.bf16 %v131, %v130
    %v149 = vpack.c.bf16 %v133, %v132
    %v150 = vld [vmem:[#allocation6] sm:$0xf]
    %v151 = vld [vmem:[#allocation6 + $0x4] sm:$0xf]
    %v152 = vld [vmem:[#allocation6 + $0x8] sm:$0xf]
    %v153 = vld [vmem:[#allocation6 + $0xc] sm:$0xf]
    %v154 = vld [vmem:[#allocation6 + $0x10] sm:$0xf]
    %v155 = vld [vmem:[#allocation6 + $0x14] sm:$0xf]
    %v156 = vld [vmem:[#allocation6 + $0x18] sm:$0xf]
    %v157 = vld [vmem:[#allocation6 + $0x1c] sm:$0xf]
    %v158 = vld [vmem:[#allocation6 + $0x20] sm:$0xf]
    %v159 = vld [vmem:[#allocation6 + $0x24] sm:$0xf]
    %v160 = vld [vmem:[#allocation6 + $0x28] sm:$0xf]
    %v161 = vld [vmem:[#allocation6 + $0x2c] sm:$0xf]
    %v162 = vld [vmem:[#allocation6 + $0x30] sm:$0xf]
    %v163 = vld [vmem:[#allocation6 + $0x34] sm:$0xf]
    %v164 = vld [vmem:[#allocation6 + $0x38] sm:$0xf]
    %v165 = vld [vmem:[#allocation6 + $0x3c] sm:$0xf]
    %v166 = vld [vmem:[%s2] sm:$0x1]
    %v168 = vlaneseq
    %v169 = vshrl.u32 %v168, 7
    %v170 = vsub.s32 0, %v169
    %v171 = vrot.slane %v166, %v170
    %v189 = vunpack.c.l.b16 %v150
    %v190 = vunpack.c.l.b16 %v151
    %v191 = vunpack.c.l.b16 %v152
    %v192 = vunpack.c.l.b16 %v153
    %v193 = vunpack.c.l.b16 %v154
    %v194 = vunpack.c.l.b16 %v155
    %v195 = vunpack.c.l.b16 %v156
    %v196 = vunpack.c.l.b16 %v157
    %v197 = vunpack.c.l.b16 %v158
    %v198 = vunpack.c.l.b16 %v159
    %v199 = vunpack.c.l.b16 %v160
    %v200 = vunpack.c.l.b16 %v161
    %v201 = vunpack.c.l.b16 %v162
    %v202 = vunpack.c.l.b16 %v163
    %v203 = vunpack.c.l.b16 %v164
    %v204 = vunpack.c.l.b16 %v165
    %v205 = vpack.c.b16 %v190, %v189
    %v206 = vpack.c.b16 %v192, %v191
    %v207 = vpack.c.b16 %v194, %v193
    %v208 = vpack.c.b16 %v196, %v195
    %v209 = vpack.c.b16 %v198, %v197
    %v210 = vpack.c.b16 %v200, %v199
    %v211 = vpack.c.b16 %v202, %v201
    %v212 = vpack.c.b16 %v204, %v203
    %221 = vmatprep.subr.bf16.mxu0 0
    %222 = vmatpush1.bf16.msra.mxu0 %v205
    %223 = vmatprep.subr.bf16.mxu0 0
    %224 = vmatpush1.bf16.msra.mxu0 %v206
    %225 = vmatprep.subr.bf16.mxu0 0
    %226 = vmatpush1.bf16.msra.mxu0 %v207
    %227 = vmatprep.subr.bf16.mxu0 0
    %228 = vmatpush1.bf16.msra.mxu0 %v208
    %229 = vmatprep.subr.bf16.mxu0 0
    %230 = vmatpush1.bf16.msra.mxu0 %v209
    %231 = vmatprep.subr.bf16.mxu0 0
    %232 = vmatpush1.bf16.msra.mxu0 %v210
    %233 = vmatprep.subr.bf16.mxu0 0
    %234 = vmatpush1.bf16.msra.mxu0 %v211
    %235 = vmatprep.subr.bf16.mxu0 0
    %236 = vmatpush1.bf16.msra.mxu0 %v212
    %237 = vmatprep.subr.bf16.mxu0 0
    %238 = vmatpush1.bf16.msra.mxu0 0
    %239 = vmatprep.subr.bf16.mxu0 0
    %240 = vmatpush1.bf16.msra.mxu0 0
    %241 = vmatprep.subr.bf16.mxu0 0
    %242 = vmatpush1.bf16.msra.mxu0 0
    %243 = vmatprep.subr.bf16.mxu0 0
    %244 = vmatpush1.bf16.msra.mxu0 0
    %245 = vmatprep.subr.bf16.mxu0 0
    %246 = vmatpush1.bf16.msra.mxu0 0
    %247 = vmatprep.subr.bf16.mxu0 0
    %248 = vmatpush1.bf16.msra.mxu0 0
    %249 = vmatprep.subr.bf16.mxu0 0
    %250 = vmatpush1.bf16.msra.mxu0 0
    %251 = vmatprep.subr.bf16.mxu0 0
    %252 = vmatpush1.bf16.msra.mxu0 0
    %253 = vmatprep.mubr.bf16.mxu0 0
    %254 = vmatmul.mubr.bf16.gmra.mrb[0].mxu0 %v134
    %v255 = vpop.f32.mrb[0].mxu0
    %v256 = vadd.f32 %v171, %v255
    %v257 = vpop.f32.mrb[0].mxu0
    %v258 = vpop.f32.mrb[0].mxu0
    %v259 = vadd.f32 %v171, %v258
    %v260 = vpop.f32.mrb[0].mxu0
    %261 = vmatprep.mubr.bf16.mxu0 0
    %262 = vmatmul.mubr.bf16.gmra.mrb[0].mxu0 %v135
    %v263 = vpop.f32.mrb[0].mxu0
    %v264 = vadd.f32 %v171, %v263
    %v265 = vpop.f32.mrb[0].mxu0
    %v266 = vpop.f32.mrb[0].mxu0
    %v267 = vadd.f32 %v171, %v266
    %v268 = vpop.f32.mrb[0].mxu0
    %269 = vmatprep.mubr.bf16.mxu0 0
    %270 = vmatmul.mubr.bf16.gmra.mrb[0].mxu0 %v136
    %v271 = vpop.f32.mrb[0].mxu0
    %v272 = vadd.f32 %v171, %v271
    %v273 = vpop.f32.mrb[0].mxu0
    %v274 = vpop.f32.mrb[0].mxu0
    %v275 = vadd.f32 %v171, %v274
    %v276 = vpop.f32.mrb[0].mxu0
    %277 = vmatprep.mubr.bf16.mxu0 0
    %278 = vmatmul.mubr.bf16.gmra.mrb[0].mxu0 %v137
    %v279 = vpop.f32.mrb[0].mxu0
    %v280 = vadd.f32 %v171, %v279
    %v281 = vpop.f32.mrb[0].mxu0
    %v282 = vpop.f32.mrb[0].mxu0
    %v283 = vadd.f32 %v171, %v282
    %v284 = vpop.f32.mrb[0].mxu0
    %285 = vmatprep.mubr.bf16.mxu0 0
    %286 = vmatmul.mubr.bf16.gmra.mrb[0].mxu0 %v138
    %v287 = vpop.f32.mrb[0].mxu0
    %v288 = vadd.f32 %v171, %v287
    %v289 = vpop.f32.mrb[0].mxu0
    %v290 = vpop.f32.mrb[0].mxu0
    %v291 = vadd.f32 %v171, %v290
    %v292 = vpop.f32.mrb[0].mxu0
    %293 = vmatprep.mubr.bf16.mxu0 0
    %294 = vmatmul.mubr.bf16.gmra.mrb[0].mxu0 %v139
    %v295 = vpop.f32.mrb[0].mxu0
    %v296 = vadd.f32 %v171, %v295
    %v297 = vpop.f32.mrb[0].mxu0
    %v298 = vpop.f32.mrb[0].mxu0
    %v299 = vadd.f32 %v171, %v298
    %v300 = vpop.f32.mrb[0].mxu0
    %301 = vmatprep.mubr.bf16.mxu0 0
    %302 = vmatmul.mubr.bf16.gmra.mrb[0].mxu0 %v140
    %v303 = vpop.f32.mrb[0].mxu0
    %v304 = vadd.f32 %v171, %v303
    %v305 = vpop.f32.mrb[0].mxu0
    %v306 = vpop.f32.mrb[0].mxu0
    %v307 = vadd.f32 %v171, %v306
    %v308 = vpop.f32.mrb[0].mxu0
    %309 = vmatprep.mubr.bf16.mxu0 0
    %310 = vmatmul.mubr.bf16.gmra.mrb[0].mxu0 %v141
    %v311 = vpop.f32.mrb[0].mxu0
    %v312 = vadd.f32 %v171, %v311
    %v313 = vpop.f32.mrb[0].mxu0
    %v314 = vpop.f32.mrb[0].mxu0
    %v315 = vadd.f32 %v171, %v314
    %v316 = vpop.f32.mrb[0].mxu0
    %317 = vmatprep.mubr.bf16.mxu0 0
    %318 = vmatmul.mubr.bf16.gmra.mrb[0].mxu0 %v142
    %v319 = vpop.f32.mrb[0].mxu0
    %v320 = vadd.f32 %v171, %v319
    %v321 = vpop.f32.mrb[0].mxu0
    %v322 = vpop.f32.mrb[0].mxu0
    %v323 = vadd.f32 %v171, %v322
    %v324 = vpop.f32.mrb[0].mxu0
    %325 = vmatprep.mubr.bf16.mxu0 0
    %326 = vmatmul.mubr.bf16.gmra.mrb[0].mxu0 %v143
    %v327 = vpop.f32.mrb[0].mxu0
    %v328 = vadd.f32 %v171, %v327
    %v329 = vpop.f32.mrb[0].mxu0
    %v330 = vpop.f32.mrb[0].mxu0
    %v331 = vadd.f32 %v171, %v330
    %v332 = vpop.f32.mrb[0].mxu0
    %333 = vmatprep.mubr.bf16.mxu0 0
    %334 = vmatmul.mubr.bf16.gmra.mrb[0].mxu0 %v144
    %v335 = vpop.f32.mrb[0].mxu0
    %v336 = vadd.f32 %v171, %v335
    %v337 = vpop.f32.mrb[0].mxu0
    %v338 = vpop.f32.mrb[0].mxu0
    %v339 = vadd.f32 %v171, %v338
    %v340 = vpop.f32.mrb[0].mxu0
    %341 = vmatprep.mubr.bf16.mxu0 0
    %342 = vmatmul.mubr.bf16.gmra.mrb[0].mxu0 %v145
    %v343 = vpop.f32.mrb[0].mxu0
    %v344 = vadd.f32 %v171, %v343
    %v345 = vpop.f32.mrb[0].mxu0
    %v346 = vpop.f32.mrb[0].mxu0
    %v347 = vadd.f32 %v171, %v346
    %v348 = vpop.f32.mrb[0].mxu0
    %349 = vmatprep.mubr.bf16.mxu0 0
    %350 = vmatmul.mubr.bf16.gmra.mrb[0].mxu0 %v146
    %v351 = vpop.f32.mrb[0].mxu0
    %v352 = vadd.f32 %v171, %v351
    %v353 = vpop.f32.mrb[0].mxu0
    %v354 = vpop.f32.mrb[0].mxu0
    %v355 = vadd.f32 %v171, %v354
    %v356 = vpop.f32.mrb[0].mxu0
    %357 = vmatprep.mubr.bf16.mxu0 0
    %358 = vmatmul.mubr.bf16.gmra.mrb[0].mxu0 %v147
    %v359 = vpop.f32.mrb[0].mxu0
    %v360 = vadd.f32 %v171, %v359
    %v361 = vpop.f32.mrb[0].mxu0
    %v362 = vpop.f32.mrb[0].mxu0
    %v363 = vadd.f32 %v171, %v362
    %v364 = vpop.f32.mrb[0].mxu0
    %365 = vmatprep.mubr.bf16.mxu0 0
    %366 = vmatmul.mubr.bf16.gmra.mrb[0].mxu0 %v148
    %v367 = vpop.f32.mrb[0].mxu0
    %v368 = vadd.f32 %v171, %v367
    %v369 = vpop.f32.mrb[0].mxu0
    %v370 = vpop.f32.mrb[0].mxu0
    %v371 = vadd.f32 %v171, %v370
    %v372 = vpop.f32.mrb[0].mxu0
    %373 = vmatprep.mubr.bf16.mxu0 0
    %374 = vmatmul.mubr.bf16.gmra.mrb[0].mxu0 %v149
    %v375 = vpop.f32.mrb[0].mxu0
    %v376 = vadd.f32 %v171, %v375
    %v377 = vpop.f32.mrb[0].mxu0
    %v378 = vpop.f32.mrb[0].mxu0
    %v379 = vadd.f32 %v171, %v378
    %v380 = vpop.f32.mrb[0].mxu0
    %381 = vdwg.mxu0
    %v382 = vtanh.pop %v256
    %v383 = vtanh.pop %v259
    %v384 = vtanh.pop %v264
    %v385 = vtanh.pop %v267
    %v386 = vtanh.pop %v272
    %v387 = vtanh.pop %v275
    %v388 = vtanh.pop %v280
    %v389 = vtanh.pop %v283
    %v390 = vtanh.pop %v288
    %v391 = vtanh.pop %v291
    %v392 = vtanh.pop %v296
    %v393 = vtanh.pop %v299
    %v394 = vtanh.pop %v304
    %v395 = vtanh.pop %v307
    %v396 = vtanh.pop %v312
    %v397 = vtanh.pop %v315
    %v398 = vtanh.pop %v320
    %v399 = vtanh.pop %v323
    %v400 = vtanh.pop %v328
    %v401 = vtanh.pop %v331
    %v402 = vtanh.pop %v336
    %v403 = vtanh.pop %v339
    %v404 = vtanh.pop %v344
    %v405 = vtanh.pop %v347
    %v406 = vtanh.pop %v352
    %v407 = vtanh.pop %v355
    %v408 = vtanh.pop %v360
    %v409 = vtanh.pop %v363
    %v410 = vtanh.pop %v368
    %v411 = vtanh.pop %v371
    %v412 = vtanh.pop %v376
    %v413 = vtanh.pop %v379
    %414 = vst [vmem:[#allocation10] sm:$0xff] %v382
    %415 = vst [vmem:[#allocation10 + $0x8] sm:$0xff] %v383
    %416 = vst [vmem:[#allocation10 + $0x10] sm:$0xff] %v384
    %417 = vst [vmem:[#allocation10 + $0x18] sm:$0xff] %v385
    %418 = vst [vmem:[#allocation10 + $0x20] sm:$0xff] %v386
    %419 = vst [vmem:[#allocation10 + $0x28] sm:$0xff] %v387
    %420 = vst [vmem:[#allocation10 + $0x30] sm:$0xff] %v388
    %421 = vst [vmem:[#allocation10 + $0x38] sm:$0xff] %v389
    %422 = vst [vmem:[#allocation10 + $0x40] sm:$0xff] %v390
    %423 = vst [vmem:[#allocation10 + $0x48] sm:$0xff] %v391
    %424 = vst [vmem:[#allocation10 + $0x50] sm:$0xff] %v392
    %425 = vst [vmem:[#allocation10 + $0x58] sm:$0xff] %v393
    %426 = vst [vmem:[#allocation10 + $0x60] sm:$0xff] %v394
    %427 = vst [vmem:[#allocation10 + $0x68] sm:$0xff] %v395
    %428 = vst [vmem:[#allocation10 + $0x70] sm:$0xff] %v396
    %429 = vst [vmem:[#allocation10 + $0x78] sm:$0xff] %v397
    %430 = vst [vmem:[#allocation10 + $0x80] sm:$0xff] %v398
    %431 = vst [vmem:[#allocation10 + $0x88] sm:$0xff] %v399
    %432 = vst [vmem:[#allocation10 + $0x90] sm:$0xff] %v400
    %433 = vst [vmem:[#allocation10 + $0x98] sm:$0xff] %v401
    %434 = vst [vmem:[#allocation10 + $0xa0] sm:$0xff] %v402
    %435 = vst [vmem:[#allocation10 + $0xa8] sm:$0xff] %v403
    %436 = vst [vmem:[#allocation10 + $0xb0] sm:$0xff] %v404
    %437 = vst [vmem:[#allocation10 + $0xb8] sm:$0xff] %v405
    %438 = vst [vmem:[#allocation10 + $0xc0] sm:$0xff] %v406
    %439 = vst [vmem:[#allocation10 + $0xc8] sm:$0xff] %v407
    %440 = vst [vmem:[#allocation10 + $0xd0] sm:$0xff] %v408
    %441 = vst [vmem:[#allocation10 + $0xd8] sm:$0xff] %v409
    %442 = vst [vmem:[#allocation10 + $0xe0] sm:$0xff] %v410
    %443 = vst [vmem:[#allocation10 + $0xe8] sm:$0xff] %v411
    %444 = vst [vmem:[#allocation10 + $0xf0] sm:$0xff] %v412
    %445 = vst [vmem:[#allocation10 + $0xf8] sm:$0xff] %v413
    %v446 = vld [vmem:[#allocation2] sm:$0xff]
    %v447 = vld [vmem:[#allocation2 + $0x8] sm:$0xff]
    %v448 = vld [vmem:[#allocation2 + $0x10] sm:$0xff]
    %v449 = vld [vmem:[#allocation2 + $0x18] sm:$0xff]
    %v450 = vld [vmem:[#allocation2 + $0x20] sm:$0xff]
    %v451 = vld [vmem:[#allocation2 + $0x28] sm:$0xff]
    %v452 = vld [vmem:[#allocation2 + $0x30] sm:$0xff]
    %v453 = vld [vmem:[#allocation2 + $0x38] sm:$0xff]
    %v454 = vld [vmem:[#allocation2 + $0x40] sm:$0xff]
    %v455 = vld [vmem:[#allocation2 + $0x48] sm:$0xff]
    %v456 = vld [vmem:[#allocation2 + $0x50] sm:$0xff]
    %v457 = vld [vmem:[#allocation2 + $0x58] sm:$0xff]
    %v458 = vld [vmem:[#allocation2 + $0x60] sm:$0xff]
    %v459 = vld [vmem:[#allocation2 + $0x68] sm:$0xff]
    %v460 = vld [vmem:[#allocation2 + $0x70] sm:$0xff]
    %v461 = vld [vmem:[#allocation2 + $0x78] sm:$0xff]
    %v462 = vld [vmem:[#allocation2 + $0x80] sm:$0xff]
    %v463 = vld [vmem:[#allocation2 + $0x88] sm:$0xff]
    %v464 = vld [vmem:[#allocation2 + $0x90] sm:$0xff]
    %v465 = vld [vmem:[#allocation2 + $0x98] sm:$0xff]
    %v466 = vld [vmem:[#allocation2 + $0xa0] sm:$0xff]
    %v467 = vld [vmem:[#allocation2 + $0xa8] sm:$0xff]
    %v468 = vld [vmem:[#allocation2 + $0xb0] sm:$0xff]
    %v469 = vld [vmem:[#allocation2 + $0xb8] sm:$0xff]
    %v470 = vld [vmem:[#allocation2 + $0xc0] sm:$0xff]
    %v471 = vld [vmem:[#allocation2 + $0xc8] sm:$0xff]
    %v472 = vld [vmem:[#allocation2 + $0xd0] sm:$0xff]
    %v473 = vld [vmem:[#allocation2 + $0xd8] sm:$0xff]
    %v474 = vld [vmem:[#allocation2 + $0xe0] sm:$0xff]
    %v475 = vld [vmem:[#allocation2 + $0xe8] sm:$0xff]
    %v476 = vld [vmem:[#allocation2 + $0xf0] sm:$0xff]
    %v477 = vld [vmem:[#allocation2 + $0xf8] sm:$0xff]
    %v478 = vpack.c.bf16 %v383, %v382
    %v479 = vpack.c.bf16 %v385, %v384
    %v480 = vpack.c.bf16 %v387, %v386
    %v481 = vpack.c.bf16 %v389, %v388
    %v482 = vpack.c.bf16 %v391, %v390
    %v483 = vpack.c.bf16 %v393, %v392
    %v484 = vpack.c.bf16 %v395, %v394
    %v485 = vpack.c.bf16 %v397, %v396
    %v486 = vpack.c.bf16 %v399, %v398
    %v487 = vpack.c.bf16 %v401, %v400
    %v488 = vpack.c.bf16 %v403, %v402
    %v489 = vpack.c.bf16 %v405, %v404
    %v490 = vpack.c.bf16 %v407, %v406
    %v491 = vpack.c.bf16 %v409, %v408
    %v492 = vpack.c.bf16 %v411, %v410
    %v493 = vpack.c.bf16 %v413, %v412
    %v494 = vld [vmem:[#allocation8] sm:$0xf]
    %v495 = vld [vmem:[#allocation8 + $0x4] sm:$0xf]
    %v496 = vld [vmem:[#allocation8 + $0x8] sm:$0xf]
    %v497 = vld [vmem:[#allocation8 + $0xc] sm:$0xf]
    %v498 = vld [vmem:[#allocation8 + $0x10] sm:$0xf]
    %v499 = vld [vmem:[#allocation8 + $0x14] sm:$0xf]
    %v500 = vld [vmem:[#allocation8 + $0x18] sm:$0xf]
    %v501 = vld [vmem:[#allocation8 + $0x1c] sm:$0xf]
    %v502 = vld [vmem:[#allocation8 + $0x20] sm:$0xf]
    %v503 = vld [vmem:[#allocation8 + $0x24] sm:$0xf]
    %v504 = vld [vmem:[#allocation8 + $0x28] sm:$0xf]
    %v505 = vld [vmem:[#allocation8 + $0x2c] sm:$0xf]
    %v506 = vld [vmem:[#allocation8 + $0x30] sm:$0xf]
    %v507 = vld [vmem:[#allocation8 + $0x34] sm:$0xf]
    %v508 = vld [vmem:[#allocation8 + $0x38] sm:$0xf]
    %v509 = vld [vmem:[#allocation8 + $0x3c] sm:$0xf]
    %v526 = vunpack.c.l.b16 %v494
    %v527 = vunpack.c.l.b16 %v495
    %v528 = vunpack.c.l.b16 %v496
    %v529 = vunpack.c.l.b16 %v497
    %v530 = vunpack.c.l.b16 %v498
    %v531 = vunpack.c.l.b16 %v499
    %v532 = vunpack.c.l.b16 %v500
    %v533 = vunpack.c.l.b16 %v501
    %v534 = vunpack.c.l.b16 %v502
    %v535 = vunpack.c.l.b16 %v503
    %v536 = vunpack.c.l.b16 %v504
    %v537 = vunpack.c.l.b16 %v505
    %v538 = vunpack.c.l.b16 %v506
    %v539 = vunpack.c.l.b16 %v507
    %v540 = vunpack.c.l.b16 %v508
    %v541 = vunpack.c.l.b16 %v509
    %v542 = vpack.c.b16 %v527, %v526
    %v543 = vpack.c.b16 %v529, %v528
    %v544 = vpack.c.b16 %v531, %v530
    %v545 = vpack.c.b16 %v533, %v532
    %v546 = vpack.c.b16 %v535, %v534
    %v547 = vpack.c.b16 %v537, %v536
    %v548 = vpack.c.b16 %v539, %v538
    %v549 = vpack.c.b16 %v541, %v540
    %558 = vmatprep.subr.bf16.mxu0 0
    %559 = vmatpush1.bf16.msra.mxu0 %v542
    %560 = vmatprep.subr.bf16.mxu0 0
    %561 = vmatpush1.bf16.msra.mxu0 %v543
    %562 = vmatprep.subr.bf16.mxu0 0
    %563 = vmatpush1.bf16.msra.mxu0 %v544
    %564 = vmatprep.subr.bf16.mxu0 0
    %565 = vmatpush1.bf16.msra.mxu0 %v545
    %566 = vmatprep.subr.bf16.mxu0 0
    %567 = vmatpush1.bf16.msra.mxu0 %v546
    %568 = vmatprep.subr.bf16.mxu0 0
    %569 = vmatpush1.bf16.msra.mxu0 %v547
    %570 = vmatprep.subr.bf16.mxu0 0
    %571 = vmatpush1.bf16.msra.mxu0 %v548
    %572 = vmatprep.subr.bf16.mxu0 0
    %573 = vmatpush1.bf16.msra.mxu0 %v549
    %574 = vmatprep.subr.bf16.mxu0 0
    %575 = vmatpush1.bf16.msra.mxu0 0
    %576 = vmatprep.subr.bf16.mxu0 0
    %577 = vmatpush1.bf16.msra.mxu0 0
    %578 = vmatprep.subr.bf16.mxu0 0
    %579 = vmatpush1.bf16.msra.mxu0 0
    %580 = vmatprep.subr.bf16.mxu0 0
    %581 = vmatpush1.bf16.msra.mxu0 0
    %582 = vmatprep.subr.bf16.mxu0 0
    %583 = vmatpush1.bf16.msra.mxu0 0
    %584 = vmatprep.subr.bf16.mxu0 0
    %585 = vmatpush1.bf16.msra.mxu0 0
    %586 = vmatprep.subr.bf16.mxu0 0
    %587 = vmatpush1.bf16.msra.mxu0 0
    %588 = vmatprep.subr.bf16.mxu0 0
    %589 = vmatpush1.bf16.msra.mxu0 0
    %590 = vmatprep.mubr.bf16.mxu0 0
    %591 = vmatmul.mubr.bf16.gmra.mrb[0].mxu0 %v478
    %v592 = vpop.f32.mrb[0].mxu0
    %v593 = vadd.f32 0.0, %v592
    %v594 = vpop.f32.mrb[0].mxu0
    %v595 = vpop.f32.mrb[0].mxu0
    %v596 = vadd.f32 0.0, %v595
    %v597 = vpop.f32.mrb[0].mxu0
    %598 = vmatprep.mubr.bf16.mxu0 0
    %599 = vmatmul.mubr.bf16.gmra.mrb[0].mxu0 %v479
    %v600 = vpop.f32.mrb[0].mxu0
    %v601 = vadd.f32 0.0, %v600
    %v602 = vpop.f32.mrb[0].mxu0
    %v603 = vpop.f32.mrb[0].mxu0
    %v604 = vadd.f32 0.0, %v603
    %v605 = vpop.f32.mrb[0].mxu0
    %606 = vmatprep.mubr.bf16.mxu0 0
    %607 = vmatmul.mubr.bf16.gmra.mrb[0].mxu0 %v480
    %v608 = vpop.f32.mrb[0].mxu0
    %v609 = vadd.f32 0.0, %v608
    %v610 = vpop.f32.mrb[0].mxu0
    %v611 = vpop.f32.mrb[0].mxu0
    %v612 = vadd.f32 0.0, %v611
    %v613 = vpop.f32.mrb[0].mxu0
    %614 = vmatprep.mubr.bf16.mxu0 0
    %615 = vmatmul.mubr.bf16.gmra.mrb[0].mxu0 %v481
    %v616 = vpop.f32.mrb[0].mxu0
    %v617 = vadd.f32 0.0, %v616
    %v618 = vpop.f32.mrb[0].mxu0
    %v619 = vpop.f32.mrb[0].mxu0
    %v620 = vadd.f32 0.0, %v619
    %v621 = vpop.f32.mrb[0].mxu0
    %622 = vmatprep.mubr.bf16.mxu0 0
    %623 = vmatmul.mubr.bf16.gmra.mrb[0].mxu0 %v482
    %v624 = vpop.f32.mrb[0].mxu0
    %v625 = vadd.f32 0.0, %v624
    %v626 = vpop.f32.mrb[0].mxu0
    %v627 = vpop.f32.mrb[0].mxu0
    %v628 = vadd.f32 0.0, %v627
    %v629 = vpop.f32.mrb[0].mxu0
    %630 = vmatprep.mubr.bf16.mxu0 0
    %631 = vmatmul.mubr.bf16.gmra.mrb[0].mxu0 %v483
    %v632 = vpop.f32.mrb[0].mxu0
    %v633 = vadd.f32 0.0, %v632
    %v634 = vpop.f32.mrb[0].mxu0
    %v635 = vpop.f32.mrb[0].mxu0
    %v636 = vadd.f32 0.0, %v635
    %v637 = vpop.f32.mrb[0].mxu0
    %638 = vmatprep.mubr.bf16.mxu0 0
    %639 = vmatmul.mubr.bf16.gmra.mrb[0].mxu0 %v484
    %v640 = vpop.f32.mrb[0].mxu0
    %v641 = vadd.f32 0.0, %v640
    %v642 = vpop.f32.mrb[0].mxu0
    %v643 = vpop.f32.mrb[0].mxu0
    %v644 = vadd.f32 0.0, %v643
    %v645 = vpop.f32.mrb[0].mxu0
    %646 = vmatprep.mubr.bf16.mxu0 0
    %647 = vmatmul.mubr.bf16.gmra.mrb[0].mxu0 %v485
    %v648 = vpop.f32.mrb[0].mxu0
    %v649 = vadd.f32 0.0, %v648
    %v650 = vpop.f32.mrb[0].mxu0
    %v651 = vpop.f32.mrb[0].mxu0
    %v652 = vadd.f32 0.0, %v651
    %v653 = vpop.f32.mrb[0].mxu0
    %654 = vmatprep.mubr.bf16.mxu0 0
    %655 = vmatmul.mubr.bf16.gmra.mrb[0].mxu0 %v486
    %v656 = vpop.f32.mrb[0].mxu0
    %v657 = vadd.f32 0.0, %v656
    %v658 = vpop.f32.mrb[0].mxu0
    %v659 = vpop.f32.mrb[0].mxu0
    %v660 = vadd.f32 0.0, %v659
    %v661 = vpop.f32.mrb[0].mxu0
    %662 = vmatprep.mubr.bf16.mxu0 0
    %663 = vmatmul.mubr.bf16.gmra.mrb[0].mxu0 %v487
    %v664 = vpop.f32.mrb[0].mxu0
    %v665 = vadd.f32 0.0, %v664
    %v666 = vpop.f32.mrb[0].mxu0
    %v667 = vpop.f32.mrb[0].mxu0
    %v668 = vadd.f32 0.0, %v667
    %v669 = vpop.f32.mrb[0].mxu0
    %670 = vmatprep.mubr.bf16.mxu0 0
    %671 = vmatmul.mubr.bf16.gmra.mrb[0].mxu0 %v488
    %v672 = vpop.f32.mrb[0].mxu0
    %v673 = vadd.f32 0.0, %v672
    %v674 = vpop.f32.mrb[0].mxu0
    %v675 = vpop.f32.mrb[0].mxu0
    %v676 = vadd.f32 0.0, %v675
    %v677 = vpop.f32.mrb[0].mxu0
    %678 = vmatprep.mubr.bf16.mxu0 0
    %679 = vmatmul.mubr.bf16.gmra.mrb[0].mxu0 %v489
    %v680 = vpop.f32.mrb[0].mxu0
    %v681 = vadd.f32 0.0, %v680
    %v682 = vpop.f32.mrb[0].mxu0
    %v683 = vpop.f32.mrb[0].mxu0
    %v684 = vadd.f32 0.0, %v683
    %v685 = vpop.f32.mrb[0].mxu0
    %686 = vmatprep.mubr.bf16.mxu0 0
    %687 = vmatmul.mubr.bf16.gmra.mrb[0].mxu0 %v490
    %v688 = vpop.f32.mrb[0].mxu0
    %v689 = vadd.f32 0.0, %v688
    %v690 = vpop.f32.mrb[0].mxu0
    %v691 = vpop.f32.mrb[0].mxu0
    %v692 = vadd.f32 0.0, %v691
    %v693 = vpop.f32.mrb[0].mxu0
    %694 = vmatprep.mubr.bf16.mxu0 0
    %695 = vmatmul.mubr.bf16.gmra.mrb[0].mxu0 %v491
    %v696 = vpop.f32.mrb[0].mxu0
    %v697 = vadd.f32 0.0, %v696
    %v698 = vpop.f32.mrb[0].mxu0
    %v699 = vpop.f32.mrb[0].mxu0
    %v700 = vadd.f32 0.0, %v699
    %v701 = vpop.f32.mrb[0].mxu0
    %702 = vmatprep.mubr.bf16.mxu0 0
    %703 = vmatmul.mubr.bf16.gmra.mrb[0].mxu0 %v492
    %v704 = vpop.f32.mrb[0].mxu0
    %v705 = vadd.f32 0.0, %v704
    %v706 = vpop.f32.mrb[0].mxu0
    %v707 = vpop.f32.mrb[0].mxu0
    %v708 = vadd.f32 0.0, %v707
    %v709 = vpop.f32.mrb[0].mxu0
    %710 = vmatprep.mubr.bf16.mxu0 0
    %711 = vmatmul.mubr.bf16.gmra.mrb[0].mxu0 %v493
    %v712 = vpop.f32.mrb[0].mxu0
    %v713 = vadd.f32 0.0, %v712
    %v714 = vpop.f32.mrb[0].mxu0
    %v715 = vpop.f32.mrb[0].mxu0
    %v716 = vadd.f32 0.0, %v715
    %v717 = vpop.f32.mrb[0].mxu0
    %718 = vdwg.mxu0
    %v719 = vadd.f32 %v446, %v593
    %v720 = vadd.f32 %v447, %v596
    %v721 = vadd.f32 %v448, %v601
    %v722 = vadd.f32 %v449, %v604
    %v723 = vadd.f32 %v450, %v609
    %v724 = vadd.f32 %v451, %v612
    %v725 = vadd.f32 %v452, %v617
    %v726 = vadd.f32 %v453, %v620
    %v727 = vadd.f32 %v454, %v625
    %v728 = vadd.f32 %v455, %v628
    %v729 = vadd.f32 %v456, %v633
    %v730 = vadd.f32 %v457, %v636
    %v731 = vadd.f32 %v458, %v641
    %v732 = vadd.f32 %v459, %v644
    %v733 = vadd.f32 %v460, %v649
    %v734 = vadd.f32 %v461, %v652
    %v735 = vadd.f32 %v462, %v657
    %v736 = vadd.f32 %v463, %v660
    %v737 = vadd.f32 %v464, %v665
    %v738 = vadd.f32 %v465, %v668
    %v739 = vadd.f32 %v466, %v673
    %v740 = vadd.f32 %v467, %v676
    %v741 = vadd.f32 %v468, %v681
    %v742 = vadd.f32 %v469, %v684
    %v743 = vadd.f32 %v470, %v689
    %v744 = vadd.f32 %v471, %v692
    %v745 = vadd.f32 %v472, %v697
    %v746 = vadd.f32 %v473, %v700
    %v747 = vadd.f32 %v474, %v705
    %v748 = vadd.f32 %v475, %v708
    %v749 = vadd.f32 %v476, %v713
    %v750 = vadd.f32 %v477, %v716
    %751 = vst [vmem:[#allocation2] sm:$0xff] %v719
    %752 = vst [vmem:[#allocation2 + $0x8] sm:$0xff] %v720
    %753 = vst [vmem:[#allocation2 + $0x10] sm:$0xff] %v721
    %754 = vst [vmem:[#allocation2 + $0x18] sm:$0xff] %v722
    %755 = vst [vmem:[#allocation2 + $0x20] sm:$0xff] %v723
    %756 = vst [vmem:[#allocation2 + $0x28] sm:$0xff] %v724
    %757 = vst [vmem:[#allocation2 + $0x30] sm:$0xff] %v725
    %758 = vst [vmem:[#allocation2 + $0x38] sm:$0xff] %v726
    %759 = vst [vmem:[#allocation2 + $0x40] sm:$0xff] %v727
    %760 = vst [vmem:[#allocation2 + $0x48] sm:$0xff] %v728
    %761 = vst [vmem:[#allocation2 + $0x50] sm:$0xff] %v729
    %762 = vst [vmem:[#allocation2 + $0x58] sm:$0xff] %v730
    %763 = vst [vmem:[#allocation2 + $0x60] sm:$0xff] %v731
    %764 = vst [vmem:[#allocation2 + $0x68] sm:$0xff] %v732
    %765 = vst [vmem:[#allocation2 + $0x70] sm:$0xff] %v733
    %766 = vst [vmem:[#allocation2 + $0x78] sm:$0xff] %v734
    %767 = vst [vmem:[#allocation2 + $0x80] sm:$0xff] %v735
    %768 = vst [vmem:[#allocation2 + $0x88] sm:$0xff] %v736
    %769 = vst [vmem:[#allocation2 + $0x90] sm:$0xff] %v737
    %770 = vst [vmem:[#allocation2 + $0x98] sm:$0xff] %v738
    %771 = vst [vmem:[#allocation2 + $0xa0] sm:$0xff] %v739
    %772 = vst [vmem:[#allocation2 + $0xa8] sm:$0xff] %v740
    %773 = vst [vmem:[#allocation2 + $0xb0] sm:$0xff] %v741
    %774 = vst [vmem:[#allocation2 + $0xb8] sm:$0xff] %v742
    %775 = vst [vmem:[#allocation2 + $0xc0] sm:$0xff] %v743
    %776 = vst [vmem:[#allocation2 + $0xc8] sm:$0xff] %v744
    %777 = vst [vmem:[#allocation2 + $0xd0] sm:$0xff] %v745
    %778 = vst [vmem:[#allocation2 + $0xd8] sm:$0xff] %v746
    %779 = vst [vmem:[#allocation2 + $0xe0] sm:$0xff] %v747
    %780 = vst [vmem:[#allocation2 + $0xe8] sm:$0xff] %v748
    %781 = vst [vmem:[#allocation2 + $0xf0] sm:$0xff] %v749
    %782 = vst [vmem:[#allocation2 + $0xf8] sm:$0xff] %v750
    // Predicated region
    $region38: #{tpu_custom_call.1} parent=1 // pred_check
      %p783 = pneg %p66
    $region39: #{tpu_custom_call.1} parent=1 // pred_check_branch
      %785 = sbr.rel (%p783) target = $region41
    $region40: #{tpu_custom_call.1} parent=1 // pred_region
      %v786 = vld [vmem:[#allocation2] sm:$0xff]
      %v787 = vld [vmem:[#allocation2 + $0x8] sm:$0xff]
      %v788 = vld [vmem:[#allocation2 + $0x10] sm:$0xff]
      %v789 = vld [vmem:[#allocation2 + $0x18] sm:$0xff]
      %v790 = vld [vmem:[#allocation2 + $0x20] sm:$0xff]
      %v791 = vld [vmem:[#allocation2 + $0x28] sm:$0xff]
      %v792 = vld [vmem:[#allocation2 + $0x30] sm:$0xff]
      %v793 = vld [vmem:[#allocation2 + $0x38] sm:$0xff]
      %v794 = vld [vmem:[#allocation2 + $0x40] sm:$0xff]
      %v795 = vld [vmem:[#allocation2 + $0x48] sm:$0xff]
      %v796 = vld [vmem:[#allocation2 + $0x50] sm:$0xff]
      %v797 = vld [vmem:[#allocation2 + $0x58] sm:$0xff]
      %v798 = vld [vmem:[#allocation2 + $0x60] sm:$0xff]
      %v799 = vld [vmem:[#allocation2 + $0x68] sm:$0xff]
      %v800 = vld [vmem:[#allocation2 + $0x70] sm:$0xff]
      %v801 = vld [vmem:[#allocation2 + $0x78] sm:$0xff]
      %v802 = vld [vmem:[#allocation2 + $0x80] sm:$0xff]
      %v803 = vld [vmem:[#allocation2 + $0x88] sm:$0xff]
      %v804 = vld [vmem:[#allocation2 + $0x90] sm:$0xff]
      %v805 = vld [vmem:[#allocation2 + $0x98] sm:$0xff]
      %v806 = vld [vmem:[#allocation2 + $0xa0] sm:$0xff]
      %v807 = vld [vmem:[#allocation2 + $0xa8] sm:$0xff]
      %v808 = vld [vmem:[#allocation2 + $0xb0] sm:$0xff]
      %v809 = vld [vmem:[#allocation2 + $0xb8] sm:$0xff]
      %v810 = vld [vmem:[#allocation2 + $0xc0] sm:$0xff]
      %v811 = vld [vmem:[#allocation2 + $0xc8] sm:$0xff]
      %v812 = vld [vmem:[#allocation2 + $0xd0] sm:$0xff]
      %v813 = vld [vmem:[#allocation2 + $0xd8] sm:$0xff]
      %v814 = vld [vmem:[#allocation2 + $0xe0] sm:$0xff]
      %v815 = vld [vmem:[#allocation2 + $0xe8] sm:$0xff]
      %v816 = vld [vmem:[#allocation2 + $0xf0] sm:$0xff]
      %v817 = vld [vmem:[#allocation2 + $0xf8] sm:$0xff]
      %v818 = vld [vmem:[%s4] sm:$0x1]
      %v820 = vlaneseq
      %v821 = vshrl.u32 %v820, 7
      %v822 = vsub.s32 0, %v821
      %v823 = vrot.slane %v818, %v822
      %v825 = vadd.f32 %v786, %v823
      %v826 = vadd.f32 %v787, %v823
      %v827 = vadd.f32 %v788, %v823
      %v828 = vadd.f32 %v789, %v823
      %v829 = vadd.f32 %v790, %v823
      %v830 = vadd.f32 %v791, %v823
      %v831 = vadd.f32 %v792, %v823
      %v832 = vadd.f32 %v793, %v823
      %v833 = vadd.f32 %v794, %v823
      %v834 = vadd.f32 %v795, %v823
      %v835 = vadd.f32 %v796, %v823
      %v836 = vadd.f32 %v797, %v823
      %v837 = vadd.f32 %v798, %v823
      %v838 = vadd.f32 %v799, %v823
      %v839 = vadd.f32 %v800, %v823
      %v840 = vadd.f32 %v801, %v823
      %v841 = vadd.f32 %v802, %v823
      %v842 = vadd.f32 %v803, %v823
      %v843 = vadd.f32 %v804, %v823
      %v844 = vadd.f32 %v805, %v823
      %v845 = vadd.f32 %v806, %v823
      %v846 = vadd.f32 %v807, %v823
      %v847 = vadd.f32 %v808, %v823
      %v848 = vadd.f32 %v809, %v823
      %v849 = vadd.f32 %v810, %v823
      %v850 = vadd.f32 %v811, %v823
      %v851 = vadd.f32 %v812, %v823
      %v852 = vadd.f32 %v813, %v823
      %v853 = vadd.f32 %v814, %v823
      %v854 = vadd.f32 %v815, %v823
      %v855 = vadd.f32 %v816, %v823
      %v856 = vadd.f32 %v817, %v823
      %857 = vst [vmem:[#allocation9] sm:$0xff] %v825
      %858 = vst [vmem:[#allocation9 + $0x8] sm:$0xff] %v826
      %859 = vst [vmem:[#allocation9 + $0x10] sm:$0xff] %v827
      %860 = vst [vmem:[#allocation9 + $0x18] sm:$0xff] %v828
      %861 = vst [vmem:[#allocation9 + $0x20] sm:$0xff] %v829
      %862 = vst [vmem:[#allocation9 + $0x28] sm:$0xff] %v830
      %863 = vst [vmem:[#allocation9 + $0x30] sm:$0xff] %v831
      %864 = vst [vmem:[#allocation9 + $0x38] sm:$0xff] %v832
      %865 = vst [vmem:[#allocation9 + $0x40] sm:$0xff] %v833
      %866 = vst [vmem:[#allocation9 + $0x48] sm:$0xff] %v834
      %867 = vst [vmem:[#allocation9 + $0x50] sm:$0xff] %v835
      %868 = vst [vmem:[#allocation9 + $0x58] sm:$0xff] %v836
      %869 = vst [vmem:[#allocation9 + $0x60] sm:$0xff] %v837
      %870 = vst [vmem:[#allocation9 + $0x68] sm:$0xff] %v838
      %871 = vst [vmem:[#allocation9 + $0x70] sm:$0xff] %v839
      %872 = vst [vmem:[#allocation9 + $0x78] sm:$0xff] %v840
      %873 = vst [vmem:[#allocation9 + $0x80] sm:$0xff] %v841
      %874 = vst [vmem:[#allocation9 + $0x88] sm:$0xff] %v842
      %875 = vst [vmem:[#allocation9 + $0x90] sm:$0xff] %v843
      %876 = vst [vmem:[#allocation9 + $0x98] sm:$0xff] %v844
      %877 = vst [vmem:[#allocation9 + $0xa0] sm:$0xff] %v845
      %878 = vst [vmem:[#allocation9 + $0xa8] sm:$0xff] %v846
      %879 = vst [vmem:[#allocation9 + $0xb0] sm:$0xff] %v847
      %880 = vst [vmem:[#allocation9 + $0xb8] sm:$0xff] %v848
      %881 = vst [vmem:[#allocation9 + $0xc0] sm:$0xff] %v849
      %882 = vst [vmem:[#allocation9 + $0xc8] sm:$0xff] %v850
      %883 = vst [vmem:[#allocation9 + $0xd0] sm:$0xff] %v851
      %884 = vst [vmem:[#allocation9 + $0xd8] sm:$0xff] %v852
      %885 = vst [vmem:[#allocation9 + $0xe0] sm:$0xff] %v853
      %886 = vst [vmem:[#allocation9 + $0xe8] sm:$0xff] %v854
      %887 = vst [vmem:[#allocation9 + $0xf0] sm:$0xff] %v855
      %888 = vst [vmem:[#allocation9 + $0xf8] sm:$0xff] %v856
    $region41: #{tpu_custom_call.1} parent=1 // pred_fallthru
      _
    // Predicated region
    $region42: #{tpu_custom_call.1} parent=1 // pred_check
      _
    $region43: #{tpu_custom_call.1} parent=1 // pred_check_branch
      %890 = sbr.rel (0) target = $region45
    $region44: #{tpu_custom_call.1} parent=1 // pred_region
      %s892 = ssub.s32 4096, 4096
      %893 = vsyncadd [#allocation5], %s892
      %s894 = sshll.u32 [#allocation9], 4
      %s895 = int_to_ptr.vmem [resolvable:$true] %s894
      %900 = dma.vmem_to_hbm [thread:$0]  %s895, 4096, %s5, [#allocation5], 128, 128, 8
    $region45: #{tpu_custom_call.1} parent=1 // pred_fallthru
      _
    // Predicated region
    $region46: #{tpu_custom_call.1} parent=1 // pred_check
      _
    $region47: #{tpu_custom_call.1} parent=1 // pred_check_branch
      %902 = sbr.rel (0) target = $region49
    $region48: #{tpu_custom_call.1} parent=1 // pred_region
      %s904 = ssub.s32 4096, 4096
      %905 = vsyncadd [#allocation11], %s904
      %s906 = sshll.u32 [#allocation10], 4
      %s907 = int_to_ptr.vmem [resolvable:$true] %s906
      %912 = dma.vmem_to_hbm [thread:$0]  %s907, 4096, %s6, [#allocation11], 128, 128, 8
    $region49: #{tpu_custom_call.1} parent=1 // pred_fallthru
      _
    // Predicated region
    $region50: #{tpu_custom_call.1} parent=1 // pred_check
      _
    $region51: #{tpu_custom_call.1} parent=1 // pred_check_branch
      %914 = sbr.rel (0) target = $region53
    $region52: #{tpu_custom_call.1} parent=1 // pred_region
      %915 = dma.done [#allocation5], 4096
    $region53: #{tpu_custom_call.1} parent=1 // pred_fallthru
      _
    // Predicated region
    $region54: #{tpu_custom_call.1} parent=1 // pred_check
      _
    $region55: #{tpu_custom_call.1} parent=1 // pred_check_branch
      %917 = sbr.rel (0) target = $region57
    $region56: #{tpu_custom_call.1} parent=1 // pred_region
      %918 = dma.done [#allocation11], 4096
    $region57: #{tpu_custom_call.1} parent=1 // pred_fallthru
      _
    %919 = vsyncpa [#allocation4], 1
    %920 = vsyncpa [#allocation7], 1
    %921 = vsyncpa [#allocation5], 1
    %922 = vsyncpa [#allocation11], 1

</llo_original>
